<compile_context>
chip_gen: v7x
topology: tpu7x:2x2x1
jax: 0.10.0
libtpu: 0.0.40
codegen_flags: <defaults>
</compile_context>

<pallas_src>
import functools

import jax
import jax.numpy as jnp
import numpy as np
from jax.experimental import pallas as pl
from jax.experimental.pallas import tpu as pltpu

_LANES = 128
_SUBLANES = 8


def _pow(x, g):
    # fast-path the default gamma=2.0 (avoids exp/log round trip on EUP)
    if g == 2.0:
        return x * x
    return jnp.power(x, g)


def _focal_loss_kernel(pred_ref, tgt_ref, loss_ref, pos_ref,
                       *, alpha, gamma, use_sigmoid):
    i = pl.program_id(1)  # inner (reduction) axis

    # loss_ref / pos_ref blocks are resident across the inner axis
    # (their block index only depends on the outer, parallel axis).
    @pl.when(i == 0)
    def _init():
        loss_ref[...] = jnp.zeros_like(loss_ref)
        pos_ref[...] = jnp.zeros_like(pos_ref)

    x = pred_ref[...].astype(jnp.float32)          # (br, 128)
    label = tgt_ref[...].astype(jnp.float32)       # (br, 128)

    if use_sigmoid:
        # p = sigmoid(x);  log(p) = -log(1+e);  log(1-p) = -x - log(1+e)
        # with e = exp(-x).  One exp + one log per element (vs exp + 2 logs),
        # -100 clamps kept to match torch BCE semantics.
        e = jnp.exp(-x)
        p = 1.0 / (1.0 + e)
        lse = jnp.log(1.0 + e)
        log_p = jnp.maximum(-lse, -100.0)
        log_1mp = jnp.maximum(-x - lse, -100.0)
    else:
        p = x
        log_p = jnp.maximum(jnp.log(p), -100.0)
        log_1mp = jnp.maximum(jnp.log(1.0 - p), -100.0)

    # mask = ~(label == -1); emulate boolean indexing by zeroing contributions
    valid = label != -1.0
    validf = valid.astype(jnp.float32)
    lab = jnp.where(valid, label, 0.0)

    # (label > 0) is unchanged by the -1 -> 0 masking: reuse it for both the
    # focal weight and the positive count; is_neg = 1 - is_pos (invalid
    # elements get zeroed by validf anyway).
    is_pos = (label > 0.0).astype(jnp.float32)
    is_neg = 1.0 - is_pos

    focal_w = (alpha * _pow(jnp.abs(lab - p), gamma) * is_pos
               + (1.0 - alpha) * _pow(jnp.abs(p), gamma) * is_neg)

    bce = -(lab * log_p + (1.0 - lab) * log_1mp)

    contrib = bce * focal_w * validf               # (br, 128)

    # Fold the rows into the resident (8, 128) accumulators with pure VPU adds
    # (no per-step cross-lane/XLU reduce, no SMEM scalar read-modify-write).
    nr = contrib.shape[0] // _SUBLANES
    loss_ref[...] += contrib.reshape(nr, _SUBLANES, _LANES).sum(axis=0)
    pos_ref[...] += is_pos.reshape(nr, _SUBLANES, _LANES).sum(axis=0)


def focal_loss(pred, target, *, alpha=0.25, gamma=2.0, use_sigmoid=True,
               block_rows=1024, num_core_splits=2):
    """Focal loss over pred/target of any matching shape (e.g. (B, HW))."""
    total = int(pred.size)
    assert int(target.size) == total

    # Flatten and lay out as (rows, 128): lane-dense and sublane-dense tiles.
    rows = pl.cdiv(total, _LANES)
    rows8 = ((rows + _SUBLANES - 1) // _SUBLANES) * _SUBLANES
    br = min(block_rows, rows8)
    br = ((br + _SUBLANES - 1) // _SUBLANES) * _SUBLANES   # multiple of 8
    chunk = num_core_splits * br
    padded_rows = ((rows8 + chunk - 1) // chunk) * chunk
    padded_total = padded_rows * _LANES

    pred_f = pred.reshape(-1)
    tgt_f = target.reshape(-1)
    pad = padded_total - total
    if pad:
        # pad labels with -1 (ignore) so padded elements contribute nothing
        pred_f = jnp.concatenate([pred_f, jnp.zeros((pad,), pred_f.dtype)])
        tgt_f = jnp.concatenate([tgt_f, jnp.full((pad,), -1, tgt_f.dtype)])
    pred2 = pred_f.reshape(padded_rows, _LANES)
    tgt2 = tgt_f.reshape(padded_rows, _LANES)

    inner = padded_rows // chunk
    grid = (num_core_splits, inner)

    kernel = functools.partial(_focal_loss_kernel, alpha=alpha, gamma=gamma,
                               use_sigmoid=use_sigmoid)

    def in_map(c, i):
        return (c * inner + i, 0)

    def out_map(c, i):
        return (c, 0, 0)

    loss_part, pos_part = pl.pallas_call(
        kernel,
        out_shape=(
            jax.ShapeDtypeStruct((num_core_splits, _SUBLANES, _LANES),
                                 jnp.float32),
            jax.ShapeDtypeStruct((num_core_splits, _SUBLANES, _LANES),
                                 jnp.float32),
        ),
        grid_spec=pltpu.PrefetchScalarGridSpec(
            num_scalar_prefetch=0,
            grid=grid,
            in_specs=[
                pl.BlockSpec((br, _LANES), in_map),
                pl.BlockSpec((br, _LANES), in_map),
            ],
            out_specs=[
                pl.BlockSpec((pl.Squeezed(), _SUBLANES, _LANES), out_map),
                pl.BlockSpec((pl.Squeezed(), _SUBLANES, _LANES), out_map),
            ],
        ),
        compiler_params=pltpu.CompilerParams(
            dimension_semantics=("parallel", "arbitrary")),
    )(pred2, tgt2)

    loss_sum = jnp.sum(loss_part)
    pos_sum = jnp.sum(pos_part)
    return loss_sum / jnp.maximum(pos_sum, 1.0)


def focal_loss_ref(pred, target, *, alpha=0.25, gamma=2.0, use_sigmoid=True):
    """Pure-JAX reference mirroring the PyTorch forward."""
    p = jax.nn.sigmoid(pred) if use_sigmoid else pred
    p = p.reshape(-1).astype(jnp.float32)
    label = target.reshape(-1).astype(jnp.float32)
    pos_num = jnp.maximum(jnp.sum((label > 0.0).astype(jnp.float32)), 1.0)
    valid = label != -1.0
    lab = jnp.where(valid, label, 0.0)
    fw = (alpha * jnp.abs(lab - p) ** gamma * (lab > 0.0)
          + (1.0 - alpha) * jnp.abs(p) ** gamma * (lab <= 0.0))
    bce = -(lab * jnp.maximum(jnp.log(p), -100.0)
            + (1.0 - lab) * jnp.maximum(jnp.log(1.0 - p), -100.0))
    loss = jnp.sum(bce * fw * valid.astype(jnp.float32))
    return loss / pos_num


if __name__ == "__main__":
    # B=2, spatial 16x16 -> HW=256
    B, H, W = 2, 16, 16
    HW = H * W
    key = jax.random.PRNGKey(0)
    k_pred, k_tgt = jax.random.split(key)

    pred = jax.random.normal(k_pred, (B, HW), dtype=jnp.float32)
    # labels in {-1 (ignore), 0 (negative), 1 (positive)}
    target = jax.random.randint(k_tgt, (B, HW), minval=-1, maxval=2).astype(
        jnp.float32)

    out = focal_loss(pred, target)
    out = jax.block_until_ready(out)

    ref = focal_loss_ref(pred, target)
    np.testing.assert_allclose(np.asarray(out), np.asarray(ref),
                               rtol=5e-5, atol=1e-6)
    print("KERNEL_OK")
</pallas_src>

<mosaic_0001>
module attributes {stable_mosaic.version = 11 : i64} {
  func.func @_focal_loss_kernel(%arg0: i32, %arg1: i32, %arg2: memref<8x128xf32, #tpu.memory_space<vmem>>, %arg3: memref<8x128xf32, #tpu.memory_space<vmem>>, %arg4: memref<1x8x128xf32, #tpu.memory_space<vmem>>, %arg5: memref<1x8x128xf32, #tpu.memory_space<vmem>>) attributes {dimension_semantics = [#tpu.dimension_semantics<parallel>, #tpu.dimension_semantics<arbitrary>], iteration_bounds = array<i64: 2, 1>, scalar_prefetch = 0 : i64, scratch_operands = 0 : i64, tpu.core_type = #tpu.core_type<tc>, window_params = [{transform_indices = @transform_0, window_bounds = array<i64: 8, 128>}, {transform_indices = @transform_1, window_bounds = array<i64: 8, 128>}, {transform_indices = @transform_2, window_bounds = array<i64: 1, 8, 128>}, {transform_indices = @transform_3, window_bounds = array<i64: 1, 8, 128>}]} {
    %c0_i32 = arith.constant 0 : i32
    %0 = arith.cmpi eq, %arg1, %c0_i32 : i32
    %1 = arith.extui %0 : i1 to i32
    %c0_i32_0 = arith.constant 0 : i32
    %2 = arith.cmpi ne, %1, %c0_i32_0 : i32
    scf.if %2 {
      %cst_33 = arith.constant 0.000000e+00 : f32
      %73 = vector.broadcast %cst_33 : f32 to vector<8x128xf32>
      %c0_34 = arith.constant 0 : index
      %c0_35 = arith.constant 0 : index
      %c0_36 = arith.constant 0 : index
      %74 = vector.load %arg4[%c0_34, %c0_35, %c0_36] : memref<1x8x128xf32, #tpu.memory_space<vmem>>, vector<1x8x128xf32>
      %75 = vector.shape_cast %74 : vector<1x8x128xf32> to vector<8x128xf32>
      %76 = vector.shape_cast %73 : vector<8x128xf32> to vector<1x8x128xf32>
      tpu.vector_store %arg4[%c0_34, %c0_35, %c0_36], %76 {strides = array<i32>} : memref<1x8x128xf32, #tpu.memory_space<vmem>>, vector<1x8x128xf32>,
      %cst_37 = arith.constant 0.000000e+00 : f32
      %77 = vector.broadcast %cst_37 : f32 to vector<8x128xf32>
      %c0_38 = arith.constant 0 : index
      %c0_39 = arith.constant 0 : index
      %c0_40 = arith.constant 0 : index
      %78 = vector.load %arg5[%c0_38, %c0_39, %c0_40] : memref<1x8x128xf32, #tpu.memory_space<vmem>>, vector<1x8x128xf32>
      %79 = vector.shape_cast %78 : vector<1x8x128xf32> to vector<8x128xf32>
      %80 = vector.shape_cast %77 : vector<8x128xf32> to vector<1x8x128xf32>
      tpu.vector_store %arg5[%c0_38, %c0_39, %c0_40], %80 {strides = array<i32>} : memref<1x8x128xf32, #tpu.memory_space<vmem>>, vector<1x8x128xf32>,
    } else {
    }
    %c0 = arith.constant 0 : index
    %c0_1 = arith.constant 0 : index
    %3 = vector.load %arg2[%c0, %c0_1] : memref<8x128xf32, #tpu.memory_space<vmem>>, vector<8x128xf32>
    %c0_2 = arith.constant 0 : index
    %c0_3 = arith.constant 0 : index
    %4 = vector.load %arg3[%c0_2, %c0_3] : memref<8x128xf32, #tpu.memory_space<vmem>>, vector<8x128xf32>
    %cst = arith.constant 0.000000e+00 : f32
    %5 = vector.broadcast %cst : f32 to vector<8x128xf32>
    %6 = arith.subf %5, %3 : vector<8x128xf32>
    %7 = math.exp %6 : vector<8x128xf32>
    %cst_4 = arith.constant 1.000000e+00 : f32
    %8 = vector.broadcast %cst_4 : f32 to vector<8x128xf32>
    %9 = arith.addf %8, %7 : vector<8x128xf32>
    %cst_5 = arith.constant 1.000000e+00 : f32
    %10 = vector.broadcast %cst_5 : f32 to vector<8x128xf32>
    %11 = arith.divf %10, %9 : vector<8x128xf32>
    %cst_6 = arith.constant 1.000000e+00 : f32
    %12 = vector.broadcast %cst_6 : f32 to vector<8x128xf32>
    %13 = arith.addf %12, %7 : vector<8x128xf32>
    %14 = math.log %13 : vector<8x128xf32>
    %cst_7 = arith.constant 0.000000e+00 : f32
    %15 = vector.broadcast %cst_7 : f32 to vector<8x128xf32>
    %16 = arith.subf %15, %14 : vector<8x128xf32>
    %cst_8 = arith.constant -1.000000e+02 : f32
    %17 = vector.broadcast %cst_8 : f32 to vector<8x128xf32>
    %18 = arith.maximumf %16, %17 : vector<8x128xf32>
    %cst_9 = arith.constant 0.000000e+00 : f32
    %19 = vector.broadcast %cst_9 : f32 to vector<8x128xf32>
    %20 = arith.subf %19, %3 : vector<8x128xf32>
    %21 = arith.subf %20, %14 : vector<8x128xf32>
    %cst_10 = arith.constant -1.000000e+02 : f32
    %22 = vector.broadcast %cst_10 : f32 to vector<8x128xf32>
    %23 = arith.maximumf %21, %22 : vector<8x128xf32>
    %cst_11 = arith.constant -1.000000e+00 : f32
    %24 = vector.broadcast %cst_11 : f32 to vector<8x128xf32>
    %25 = arith.cmpf one, %4, %24 : vector<8x128xf32>
    %26 = arith.extui %25 : vector<8x128xi1> to vector<8x128xi32>
    %27 = arith.sitofp %26 : vector<8x128xi32> to vector<8x128xf32>
    %cst_12 = arith.constant 0.000000e+00 : f32
    %28 = vector.broadcast %cst_12 : f32 to vector<8x128xf32>
    %29 = arith.select %25, %4, %28 : vector<8x128xi1>, vector<8x128xf32>
    %cst_13 = arith.constant 0.000000e+00 : f32
    %30 = vector.broadcast %cst_13 : f32 to vector<8x128xf32>
    %31 = arith.cmpf ogt, %4, %30 : vector<8x128xf32>
    %32 = arith.extui %31 : vector<8x128xi1> to vector<8x128xi32>
    %33 = arith.sitofp %32 : vector<8x128xi32> to vector<8x128xf32>
    %cst_14 = arith.constant 1.000000e+00 : f32
    %34 = vector.broadcast %cst_14 : f32 to vector<8x128xf32>
    %35 = arith.subf %34, %33 : vector<8x128xf32>
    %36 = arith.subf %29, %11 : vector<8x128xf32>
    %37 = math.absf %36 : vector<8x128xf32>
    %38 = arith.mulf %37, %37 : vector<8x128xf32>
    %cst_15 = arith.constant 2.500000e-01 : f32
    %39 = vector.broadcast %cst_15 : f32 to vector<8x128xf32>
    %40 = arith.mulf %39, %38 : vector<8x128xf32>
    %41 = arith.mulf %40, %33 : vector<8x128xf32>
    %42 = math.absf %11 : vector<8x128xf32>
    %43 = arith.mulf %42, %42 : vector<8x128xf32>
    %cst_16 = arith.constant 7.500000e-01 : f32
    %44 = vector.broadcast %cst_16 : f32 to vector<8x128xf32>
    %45 = arith.mulf %44, %43 : vector<8x128xf32>
    %46 = arith.mulf %45, %35 : vector<8x128xf32>
    %47 = arith.addf %41, %46 : vector<8x128xf32>
    %48 = arith.mulf %29, %18 : vector<8x128xf32>
    %cst_17 = arith.constant 1.000000e+00 : f32
    %49 = vector.broadcast %cst_17 : f32 to vector<8x128xf32>
    %50 = arith.subf %49, %29 : vector<8x128xf32>
    %51 = arith.mulf %50, %23 : vector<8x128xf32>
    %52 = arith.addf %48, %51 : vector<8x128xf32>
    %cst_18 = arith.constant 0.000000e+00 : f32
    %53 = vector.broadcast %cst_18 : f32 to vector<8x128xf32>
    %54 = arith.subf %53, %52 : vector<8x128xf32>
    %55 = arith.mulf %54, %47 : vector<8x128xf32>
    %56 = arith.mulf %55, %27 : vector<8x128xf32>
    %c0_19 = arith.constant 0 : index
    %c0_20 = arith.constant 0 : index
    %c0_21 = arith.constant 0 : index
    %57 = vector.load %arg4[%c0_19, %c0_20, %c0_21] : memref<1x8x128xf32, #tpu.memory_space<vmem>>, vector<1x8x128xf32>
    %58 = vector.shape_cast %57 : vector<1x8x128xf32> to vector<8x128xf32>
    %59 = vector.shape_cast %56 : vector<8x128xf32> to vector<1x8x128xf32>
    %cst_22 = arith.constant dense<0.000000e+00> : vector<8x128xf32>
    %60 = vector.multi_reduction <add>, %59, %cst_22 [0] : vector<1x8x128xf32> to vector<8x128xf32>
    %61 = arith.addf %58, %60 : vector<8x128xf32>
    %c0_23 = arith.constant 0 : index
    %c0_24 = arith.constant 0 : index
    %c0_25 = arith.constant 0 : index
    %62 = vector.load %arg4[%c0_23, %c0_24, %c0_25] : memref<1x8x128xf32, #tpu.memory_space<vmem>>, vector<1x8x128xf32>
    %63 = vector.shape_cast %62 : vector<1x8x128xf32> to vector<8x128xf32>
    %64 = vector.shape_cast %61 : vector<8x128xf32> to vector<1x8x128xf32>
    tpu.vector_store %arg4[%c0_23, %c0_24, %c0_25], %64 {strides = array<i32>} : memref<1x8x128xf32, #tpu.memory_space<vmem>>, vector<1x8x128xf32>,
    %c0_26 = arith.constant 0 : index
    %c0_27 = arith.constant 0 : index
    %c0_28 = arith.constant 0 : index
    %65 = vector.load %arg5[%c0_26, %c0_27, %c0_28] : memref<1x8x128xf32, #tpu.memory_space<vmem>>, vector<1x8x128xf32>
    %66 = vector.shape_cast %65 : vector<1x8x128xf32> to vector<8x128xf32>
    %67 = vector.shape_cast %33 : vector<8x128xf32> to vector<1x8x128xf32>
    %cst_29 = arith.constant dense<0.000000e+00> : vector<8x128xf32>
    %68 = vector.multi_reduction <add>, %67, %cst_29 [0] : vector<1x8x128xf32> to vector<8x128xf32>
    %69 = arith.addf %66, %68 : vector<8x128xf32>
    %c0_30 = arith.constant 0 : index
    %c0_31 = arith.constant 0 : index
    %c0_32 = arith.constant 0 : index
    %70 = vector.load %arg5[%c0_30, %c0_31, %c0_32] : memref<1x8x128xf32, #tpu.memory_space<vmem>>, vector<1x8x128xf32>
    %71 = vector.shape_cast %70 : vector<1x8x128xf32> to vector<8x128xf32>
    %72 = vector.shape_cast %69 : vector<8x128xf32> to vector<1x8x128xf32>
    tpu.vector_store %arg5[%c0_30, %c0_31, %c0_32], %72 {strides = array<i32>} : memref<1x8x128xf32, #tpu.memory_space<vmem>>, vector<1x8x128xf32>,
    return
  }
  func.func @transform_0(%arg0: i32, %arg1: i32) -> (i32, i32) {
    %c1_i32 = arith.constant 1 : i32
    %0 = arith.muli %arg0, %c1_i32 : i32
    %1 = arith.addi %0, %arg1 : i32
    %c0_i32 = arith.constant 0 : i32
    %c0_i32_0 = arith.constant 0 : i32
    return %1, %c0_i32 : i32, i32
  }
  func.func @transform_1(%arg0: i32, %arg1: i32) -> (i32, i32) {
    %c1_i32 = arith.constant 1 : i32
    %0 = arith.muli %arg0, %c1_i32 : i32
    %1 = arith.addi %0, %arg1 : i32
    %c0_i32 = arith.constant 0 : i32
    %c0_i32_0 = arith.constant 0 : i32
    return %1, %c0_i32 : i32, i32
  }
  func.func @transform_2(%arg0: i32, %arg1: i32) -> (i32, i32, i32) {
    %c0_i32 = arith.constant 0 : i32
    %c0_i32_0 = arith.constant 0 : i32
    %c0_i32_1 = arith.constant 0 : i32
    return %arg0, %c0_i32, %c0_i32_0 : i32, i32, i32
  }
  func.func @transform_3(%arg0: i32, %arg1: i32) -> (i32, i32, i32) {
    %c0_i32 = arith.constant 0 : i32
    %c0_i32_0 = arith.constant 0 : i32
    %c0_i32_1 = arith.constant 0 : i32
    return %arg0, %c0_i32, %c0_i32_0 : i32, i32, i32
  }
}

</mosaic_0001>

<llo_original>
// kernel: tpu_custom_call.1
$region0: #{tpu_custom_call.1}
  #allocation0 [shape = 'u32[]', space=smem, size = 0x4, offset = 0x4, fixed_abs, tag = 'smem constant byte address 0x4 - core index']
  #allocation1 [shape = 'u32[144,128]{1,0:T(1,128)}', space=vmem, size = 0x12000, scoped, tag = 'internal scratch']
  %s0 = inlined_call_operand.hbm [shape: f32[16,128], index: 0, kind: input, shape index: {}]
  %s1 = inlined_call_operand.hbm [shape: f32[16,128], index: 1, kind: input, shape index: {}]
  %s2 = inlined_call_operand.hbm [shape: f32[2,8,128], index: 2, kind: output, shape index: {0}]
  %s3 = inlined_call_operand.hbm [shape: f32[2,8,128], index: 3, kind: output, shape index: {1}]
  %4 = xla_tuple %s2, %s3
  %s5 = sld [smem:[#allocation0]]
  $region61: #{tpu_custom_call.1} parent=0
    _
  %s7 = ssub.s32 1, %s5
  %s8 = scalar_select 0, %s7, %s5
  $region1: #{tpu_custom_call.1} parent=0
    #allocation2 [shape = 'u8[8192]{0}', space=vmem, size = 0x2000, scoped, tag = 'input window, operand 0']
    #allocation3 [shape = 's32[2]{0}', space=sflag, size = 0x8, scoped, tag = 'scoped memory for tpu_custom_call.1']
    #allocation4 [shape = 's32[2]{0}', space=sflag, size = 0x8, scoped, tag = 'scoped memory for tpu_custom_call.1']
    #allocation5 [shape = 'u8[8192]{0}', space=vmem, size = 0x2000, scoped, tag = 'input window, operand 1']
    #allocation6 [shape = 's32[2]{0}', space=sflag, size = 0x8, scoped, tag = 'scoped memory for tpu_custom_call.1']
    #allocation7 [shape = 'u8[8192]{0}', space=vmem, size = 0x2000, scoped, tag = 'output window, operand 0']
    #allocation8 [shape = 'u8[8192]{0}', space=vmem, size = 0x2000, scoped, tag = 'output window, operand 1']
    #allocation9 [shape = 's32[2]{0}', space=sflag, size = 0x8, scoped, tag = 'scoped memory for tpu_custom_call.1']
    %9 = vsyncpa [#allocation3], 0
    %s10 = scalar_lea.sflag [#allocation3], 1
    %11 = vsyncpa %s10, 0
    %12 = vsyncpa [#allocation6], 0
    %s13 = scalar_lea.sflag [#allocation6], 1
    %14 = vsyncpa %s13, 0
    %15 = vsyncpa [#allocation4], 0
    %s16 = scalar_lea.sflag [#allocation4], 1
    %17 = vsyncpa %s16, 0
    %18 = vsyncpa [#allocation9], 0
    %s19 = scalar_lea.sflag [#allocation9], 1
    %20 = vsyncpa %s19, 0
    loop: start=0, step=1, limit=4
    $region2: #{tpu_custom_call.1} parent=1 // loop_pre_header
      _
    $region3: #{tpu_custom_call.1} parent=1 // loop_header
      %s22 = sphi 0, %s26
      %p23 = scmp.ge.s32.totalorder %s22, 4
      %s29 = sphi 0, %s41
      %s30 = sphi 0, %s37
      %s31 = sphi 0, %s29
      %s32 = sphi 0, %s30
      %s33 = sphi 0, %s31
      %s34 = sphi 0, %s32
      %s46 = sphi 0, %s48
      %s49 = sphi 0, %s46
      %s50 = sphi 0, %s49
      %s66 = sphi 0, %s50
      %s74 = sphi 0, %s76
      %s77 = sphi 0, %s74
      %s78 = sphi 0, %s77
      %s94 = sphi 0, %s78
      %s100 = sphi 0, %s102
      %s103 = sphi 0, %s100
      %s104 = sphi 0, %s103
      %s120 = sphi 0, %s104
      %s126 = sphi 0, %s128
      %s129 = sphi 0, %s126
      %s130 = sphi 0, %s129
      %s146 = sphi 0, %s130
    $region4: #{tpu_custom_call.1} parent=1 // loop_header_branch
      %25 = sbr.rel (%p23) target = $region8
    $region5: #{tpu_custom_call.1} parent=1 // loop_body
      %s27 = ssub.s32 %s22, 1
      %s28 = ssub.s32 %s22, 2
      %s35 = sadd.s32 1, %s30
      %p36 = scmp.ge.s32.totalorder %s35, 1
      %s37 = scalar_select %p36, 0, %s35
      %s38 = sadd.s32 1, %s29
      %s39 = scalar_select %p36, %s38, %s29
      %p40 = scmp.ge.s32.totalorder %s39, 2
      %s41 = scalar_select %p40, 0, %s39
      %s42 = sadd.s32 %s29, %s30
      %s43 = sadd.s32 %s41, %s37
      %s44 = ssub.s32 %s42, %s43
      %p45 = scmp.eq.s32.totalorder %s44, 0
      %s47 = sadd.s32 %s46, 1
      %s48 = scalar_select %p45, %s46, %s47
      %p51 = pneg %p45
      %p52 = scmp.eq.s32.totalorder %s22, 1
      %p53 = por %p51, %p52
      %p54 = scmp.ne.s32.totalorder %s46, %s49
      %p55 = scmp.eq.s32.totalorder %s22, 0
      %p56 = por %p54, %p55
      %p57 = scmp.ne.s32.totalorder %s46, %s49
      %p58 = scmp.eq.s32.totalorder %s27, 1
      %p59 = por %p57, %p58
      %p60 = scmp.ne.s32.totalorder %s49, %s50
      %p61 = scmp.eq.s32.totalorder %s27, 0
      %p62 = por %p60, %p61
      %p63 = scmp.ne.s32.totalorder %s49, %s50
      %p64 = scmp.eq.s32.totalorder %s28, 1
      %p65 = por %p63, %p64
      %p67 = scmp.ne.s32.totalorder %s50, %s66
      %p68 = scmp.eq.s32.totalorder %s28, 0
      %p69 = por %p67, %p68
      %s70 = sadd.s32 %s29, %s30
      %s71 = sadd.s32 %s41, %s37
      %s72 = ssub.s32 %s70, %s71
      %p73 = scmp.eq.s32.totalorder %s72, 0
      %s75 = sadd.s32 %s74, 1
      %s76 = scalar_select %p73, %s74, %s75
      %p79 = pneg %p73
      %p80 = scmp.eq.s32.totalorder %s22, 1
      %p81 = por %p79, %p80
      %p82 = scmp.ne.s32.totalorder %s74, %s77
      %p83 = scmp.eq.s32.totalorder %s22, 0
      %p84 = por %p82, %p83
      %p85 = scmp.ne.s32.totalorder %s74, %s77
      %p86 = scmp.eq.s32.totalorder %s27, 1
      %p87 = por %p85, %p86
      %p88 = scmp.ne.s32.totalorder %s77, %s78
      %p89 = scmp.eq.s32.totalorder %s27, 0
      %p90 = por %p88, %p89
      %p91 = scmp.ne.s32.totalorder %s77, %s78
      %p92 = scmp.eq.s32.totalorder %s28, 1
      %p93 = por %p91, %p92
      %p95 = scmp.ne.s32.totalorder %s78, %s94
      %p96 = scmp.eq.s32.totalorder %s28, 0
      %p97 = por %p95, %p96
      %s98 = ssub.s32 %s29, %s41
      %p99 = scmp.eq.s32.totalorder %s98, 0
      %s101 = sadd.s32 %s100, 1
      %s102 = scalar_select %p99, %s100, %s101
      %p105 = pneg %p99
      %p106 = scmp.eq.s32.totalorder %s22, 1
      %p107 = por %p105, %p106
      %p108 = scmp.ne.s32.totalorder %s100, %s103
      %p109 = scmp.eq.s32.totalorder %s22, 0
      %p110 = por %p108, %p109
      %p111 = scmp.ne.s32.totalorder %s100, %s103
      %p112 = scmp.eq.s32.totalorder %s27, 1
      %p113 = por %p111, %p112
      %p114 = scmp.ne.s32.totalorder %s103, %s104
      %p115 = scmp.eq.s32.totalorder %s27, 0
      %p116 = por %p114, %p115
      %p117 = scmp.ne.s32.totalorder %s103, %s104
      %p118 = scmp.eq.s32.totalorder %s28, 1
      %p119 = por %p117, %p118
      %p121 = scmp.ne.s32.totalorder %s104, %s120
      %p122 = scmp.eq.s32.totalorder %s28, 0
      %p123 = por %p121, %p122
      %s124 = ssub.s32 %s29, %s41
      %p125 = scmp.eq.s32.totalorder %s124, 0
      %s127 = sadd.s32 %s126, 1
      %s128 = scalar_select %p125, %s126, %s127
      %p131 = pneg %p125
      %p132 = scmp.eq.s32.totalorder %s22, 1
      %p133 = por %p131, %p132
      %p134 = scmp.ne.s32.totalorder %s126, %s129
      %p135 = scmp.eq.s32.totalorder %s22, 0
      %p136 = por %p134, %p135
      %p137 = scmp.ne.s32.totalorder %s126, %s129
      %p138 = scmp.eq.s32.totalorder %s27, 1
      %p139 = por %p137, %p138
      %p140 = scmp.ne.s32.totalorder %s129, %s130
      %p141 = scmp.eq.s32.totalorder %s27, 0
      %p142 = por %p140, %p141
      %p143 = scmp.ne.s32.totalorder %s129, %s130
      %p144 = scmp.eq.s32.totalorder %s28, 1
      %p145 = por %p143, %p144
      %p147 = scmp.ne.s32.totalorder %s130, %s146
      %p148 = scmp.eq.s32.totalorder %s28, 0
      %p149 = por %p147, %p148
      %p150 = scmp.le.s32.totalorder 1, %s22
      %p151 = scmp.lt.s32.totalorder %s22, 3
      %p152 = pnand %p150, %p151
      %p153 = pneg %p152
      // Predicated region
      $region9: #{tpu_custom_call.1} parent=5 // pred_check
        _
      $region10: #{tpu_custom_call.1} parent=5 // pred_check_branch
        %155 = sbr.rel (%p152) target = $region12
      $region11: #{tpu_custom_call.1} parent=5 // pred_region
        %s156 = ssub.s32 %s22, 1
      $region12: #{tpu_custom_call.1} parent=5 // pred_fallthru
        _
      %p157 = scmp.lt.s32.totalorder %s22, 2
      // Predicated region
      $region13: #{tpu_custom_call.1} parent=5 // pred_check
        %p158 = pneg %p157
      $region14: #{tpu_custom_call.1} parent=5 // pred_check_branch
        %160 = sbr.rel (%p158) target = $region16
      $region15: #{tpu_custom_call.1} parent=5 // pred_region
        // Predicated region
        $region17: #{tpu_custom_call.1} parent=15 // pred_check
          %p161 = pneg %p56
        $region18: #{tpu_custom_call.1} parent=15 // pred_check_branch
          %163 = sbr.rel (%p161) target = $region20
        $region19: #{tpu_custom_call.1} parent=15 // pred_region
          %s164 = sand.u32 %s46, 1
          %s165 = scalar_lea.sflag [#allocation3], %s164
          %s166 = sand.u32 %s46, 1
          %s167 = smul.addr %s166, 8
          %s168 = scalar_lea.vmem [#allocation2], %s167
          %s169 = sadd.s32 %s29, %s30
          %s171 = ssub.s32 128, 128
          %172 = vsyncadd %s165, %s171
          %s173 = smul.addr %s169, 128
          %s174 = scalar_lea.hbm %s0, %s173
          %s176 = sshll.u32 %s168, 4
          %s177 = int_to_ptr.vmem [resolvable:$true] %s176
          %179 = dma.hbm_to_vmem [thread:$0]  %s174, 128, %s177, %s165
        $region20: #{tpu_custom_call.1} parent=15 // pred_fallthru
          _
        // Predicated region
        $region21: #{tpu_custom_call.1} parent=15 // pred_check
          %p180 = pneg %p84
        $region22: #{tpu_custom_call.1} parent=15 // pred_check_branch
          %182 = sbr.rel (%p180) target = $region24
        $region23: #{tpu_custom_call.1} parent=15 // pred_region
          %s183 = sand.u32 %s74, 1
          %s184 = scalar_lea.sflag [#allocation6], %s183
          %s185 = sand.u32 %s74, 1
          %s186 = smul.addr %s185, 8
          %s187 = scalar_lea.vmem [#allocation5], %s186
          %s188 = sadd.s32 %s29, %s30
          %s190 = ssub.s32 128, 128
          %191 = vsyncadd %s184, %s190
          %s192 = smul.addr %s188, 128
          %s193 = scalar_lea.hbm %s1, %s192
          %s195 = sshll.u32 %s187, 4
          %s196 = int_to_ptr.vmem [resolvable:$true] %s195
          %198 = dma.hbm_to_vmem [thread:$0]  %s193, 128, %s196, %s184
        $region24: #{tpu_custom_call.1} parent=15 // pred_fallthru
          _
      $region16: #{tpu_custom_call.1} parent=5 // pred_fallthru
        _
      %p199 = scmp.le.s32.totalorder 1, %s22
      %p200 = scmp.lt.s32.totalorder %s22, 3
      %p201 = pnand %p199, %p200
      %p202 = pneg %p201
      // Predicated region
      $region25: #{tpu_custom_call.1} parent=5 // pred_check
        _
      $region26: #{tpu_custom_call.1} parent=5 // pred_check_branch
        %204 = sbr.rel (%p201) target = $region28
      $region27: #{tpu_custom_call.1} parent=5 // pred_region
        %s205 = ssub.s32 %s22, 1
        %s206 = sand.u32 %s49, 1
        %s207 = scalar_lea.sflag [#allocation3], %s206
        %s208 = sand.u32 %s49, 1
        %s209 = smul.addr %s208, 8
        %s210 = scalar_lea.vmem [#allocation2], %s209
        // Predicated region
        $region29: #{tpu_custom_call.1} parent=27 // pred_check
          %p211 = pneg %p62
        $region30: #{tpu_custom_call.1} parent=27 // pred_check_branch
          %213 = sbr.rel (%p211) target = $region32
        $region31: #{tpu_custom_call.1} parent=27 // pred_region
          %214 = dma.done %s207, 128
        $region32: #{tpu_custom_call.1} parent=27 // pred_fallthru
          _
        %s215 = sand.u32 %s77, 1
        %s216 = scalar_lea.sflag [#allocation6], %s215
        %s217 = sand.u32 %s77, 1
        %s218 = smul.addr %s217, 8
        %s219 = scalar_lea.vmem [#allocation5], %s218
        // Predicated region
        $region33: #{tpu_custom_call.1} parent=27 // pred_check
          %p220 = pneg %p90
        $region34: #{tpu_custom_call.1} parent=27 // pred_check_branch
          %222 = sbr.rel (%p220) target = $region36
        $region35: #{tpu_custom_call.1} parent=27 // pred_region
          %223 = dma.done %s216, 128
        $region36: #{tpu_custom_call.1} parent=27 // pred_fallthru
          _
        %s224 = sand.u32 %s49, 1
        %s225 = scalar_lea.sflag [#allocation3], %s224
        %s226 = sand.u32 %s49, 1
        %s227 = smul.addr %s226, 8
        %s228 = scalar_lea.vmem [#allocation2], %s227
        %p229 = pneg %p62
        %p230 = pneg %p59
        %s231 = sand.u32 %s77, 1
        %s232 = scalar_lea.sflag [#allocation6], %s231
        %s233 = sand.u32 %s77, 1
        %s234 = smul.addr %s233, 8
        %s235 = scalar_lea.vmem [#allocation5], %s234
        %p236 = pneg %p90
        %p237 = pneg %p87
        %p238 = pneg %p116
        %p239 = pneg %p113
        %s240 = sand.u32 %s103, 1
        %s241 = scalar_lea.sflag [#allocation4], %s240
        %s242 = sand.u32 %s103, 1
        %s243 = smul.addr %s242, 8
        %s244 = scalar_lea.vmem [#allocation7], %s243
        %p245 = pneg %p142
        %p246 = pneg %p139
        %s247 = sand.u32 %s129, 1
        %s248 = scalar_lea.sflag [#allocation9], %s247
        %s249 = sand.u32 %s129, 1
        %s250 = smul.addr %s249, 8
        %s251 = scalar_lea.vmem [#allocation8], %s250
        %s252 = sadd.s32 %s31, %s32
        %s253 = sadd.s32 %s31, %s32
        %p254 = scmp.eq.s32.totalorder %s32, 0
        // Predicated region
        $region37: #{tpu_custom_call.1} parent=27 // pred_check
          %p255 = pneg %p254
        $region38: #{tpu_custom_call.1} parent=27 // pred_check_branch
          %257 = sbr.rel (%p255) target = $region40
        $region39: #{tpu_custom_call.1} parent=27 // pred_region
          %258 = vst [vmem:[%s244] sm:$0xff] 0.0
          %259 = vst [vmem:[%s251] sm:$0xff] 0.0
        $region40: #{tpu_custom_call.1} parent=27 // pred_fallthru
          _
        %v260 = vld [vmem:[%s210] sm:$0xff]
        %v261 = vld [vmem:[%s219] sm:$0xff]
        %v262 = vsub.f32 0.0, %v260
        %v263 = vmul.f32 %v262, 1.442695
        %v264 = vpow.pop %v263
        %v265 = vadd.f32 %v264, 1.0
        %v266 = vrcp.pop %v265
        %v267 = vmul.f32 1.0, %v266
        %v268 = vlog2.pop %v265
        %v269 = vmul.f32 %v268, 0.6931472
        %v270 = vsub.f32 0.0, %v269
        %v271 = vmax.f32 %v270, -100.0
        %v272 = vsub.f32 %v262, %v269
        %v273 = vmax.f32 %v272, -100.0
        %vm274 = vcmp.ne.f32.partialorder %v261, -1.0
        %v275 = vsel %vm274, 1, 0
        %v276 = vcvt.s32.f32 %v275
        %v277 = vsel %vm274, %v261, 0.0
        %vm278 = vcmp.gt.f32.partialorder %v261, 0.0
        %v279 = vsel %vm278, 1, 0
        %v280 = vcvt.s32.f32 %v279
        %v281 = vsub.f32 1.0, %v280
        %v282 = vsub.f32 %v277, %v267
        %v283 = vand.u32 2147483647, %v282
        %v284 = vmul.f32 %v283, %v283
        %v285 = vmul.f32 %v284, 0.25
        %v286 = vmul.f32 %v285, %v280
        %v287 = vand.u32 2147483647, %v267
        %v288 = vmul.f32 %v287, %v287
        %v289 = vmul.f32 %v288, 0.75
        %v290 = vmul.f32 %v289, %v281
        %v291 = vadd.f32 %v286, %v290
        %v292 = vmul.f32 %v277, %v271
        %v293 = vsub.f32 1.0, %v277
        %v294 = vmul.f32 %v293, %v273
        %v295 = vadd.f32 %v292, %v294
        %v296 = vsub.f32 0.0, %v295
        %v297 = vmul.f32 %v296, %v291
        %v298 = vmul.f32 %v297, %v276
        %v299 = vld [vmem:[%s244] sm:$0xff]
        %v300 = vadd.f32 %v298, 0.0
        %v301 = vadd.f32 %v299, %v300
        %302 = vst [vmem:[%s244] sm:$0xff] %v301
        %v303 = vld [vmem:[%s251] sm:$0xff]
        %v304 = vadd.f32 %v280, 0.0
        %v305 = vadd.f32 %v303, %v304
        %306 = vst [vmem:[%s251] sm:$0xff] %v305
        %s307 = sand.u32 %s103, 1
        %s308 = scalar_lea.sflag [#allocation4], %s307
        %s309 = sand.u32 %s103, 1
        %s310 = smul.addr %s309, 8
        %s311 = scalar_lea.vmem [#allocation7], %s310
        %s312 = sand.u32 %s129, 1
        %s313 = scalar_lea.sflag [#allocation9], %s312
        %s314 = sand.u32 %s129, 1
        %s315 = smul.addr %s314, 8
        %s316 = scalar_lea.vmem [#allocation8], %s315
        // Predicated region
        $region41: #{tpu_custom_call.1} parent=27 // pred_check
          %p317 = pneg %p113
        $region42: #{tpu_custom_call.1} parent=27 // pred_check_branch
          %319 = sbr.rel (%p317) target = $region44
        $region43: #{tpu_custom_call.1} parent=27 // pred_region
          %s321 = ssub.s32 128, 128
          %322 = vsyncadd %s308, %s321
          %s323 = smul.addr %s31, 128
          %s324 = scalar_lea.hbm %s2, %s323
          %s326 = sshll.u32 %s311, 4
          %s327 = int_to_ptr.vmem [resolvable:$true] %s326
          %329 = dma.vmem_to_hbm [thread:$0]  %s327, 128, %s324, %s308
        $region44: #{tpu_custom_call.1} parent=27 // pred_fallthru
          _
        // Predicated region
        $region45: #{tpu_custom_call.1} parent=27 // pred_check
          %p330 = pneg %p139
        $region46: #{tpu_custom_call.1} parent=27 // pred_check_branch
          %332 = sbr.rel (%p330) target = $region48
        $region47: #{tpu_custom_call.1} parent=27 // pred_region
          %s334 = ssub.s32 128, 128
          %335 = vsyncadd %s313, %s334
          %s336 = smul.addr %s31, 128
          %s337 = scalar_lea.hbm %s3, %s336
          %s339 = sshll.u32 %s316, 4
          %s340 = int_to_ptr.vmem [resolvable:$true] %s339
          %342 = dma.vmem_to_hbm [thread:$0]  %s340, 128, %s337, %s313
        $region48: #{tpu_custom_call.1} parent=27 // pred_fallthru
          _
      $region28: #{tpu_custom_call.1} parent=5 // pred_fallthru
        _
      %p343 = scmp.le.s32.totalorder 2, %s22
      // Predicated region
      $region49: #{tpu_custom_call.1} parent=5 // pred_check
        %p344 = pneg %p343
      $region50: #{tpu_custom_call.1} parent=5 // pred_check_branch
        %346 = sbr.rel (%p344) target = $region52
      $region51: #{tpu_custom_call.1} parent=5 // pred_region
        %s347 = ssub.s32 %s22, 2
        // Predicated region
        $region53: #{tpu_custom_call.1} parent=51 // pred_check
          %p348 = pneg %p119
        $region54: #{tpu_custom_call.1} parent=51 // pred_check_branch
          %350 = sbr.rel (%p348) target = $region56
        $region55: #{tpu_custom_call.1} parent=51 // pred_region
          %s351 = sand.u32 %s104, 1
          %s352 = scalar_lea.sflag [#allocation4], %s351
          %s353 = sand.u32 %s104, 1
          %s354 = smul.addr %s353, 8
          %s355 = scalar_lea.vmem [#allocation7], %s354
          %356 = dma.done %s352, 128
        $region56: #{tpu_custom_call.1} parent=51 // pred_fallthru
          _
        // Predicated region
        $region57: #{tpu_custom_call.1} parent=51 // pred_check
          %p357 = pneg %p145
        $region58: #{tpu_custom_call.1} parent=51 // pred_check_branch
          %359 = sbr.rel (%p357) target = $region60
        $region59: #{tpu_custom_call.1} parent=51 // pred_region
          %s360 = sand.u32 %s130, 1
          %s361 = scalar_lea.sflag [#allocation9], %s360
          %s362 = sand.u32 %s130, 1
          %s363 = smul.addr %s362, 8
          %s364 = scalar_lea.vmem [#allocation8], %s363
          %365 = dma.done %s361, 128
        $region60: #{tpu_custom_call.1} parent=51 // pred_fallthru
          _
      $region52: #{tpu_custom_call.1} parent=5 // pred_fallthru
        _
    $region6: #{tpu_custom_call.1} parent=1 // loop_footer
      %s26 = sadd.s32 1, %s22
    $region7: #{tpu_custom_call.1} parent=1 // loop_footer_branch
      %21 = sbr.rel target = $region3
    $region8: #{tpu_custom_call.1} parent=1 // loop_exit
      _
    %366 = vsyncpa [#allocation3], 1
    %s367 = scalar_lea.sflag [#allocation3], 1
    %368 = vsyncpa %s367, 1
    %369 = vsyncpa [#allocation6], 1
    %s370 = scalar_lea.sflag [#allocation6], 1
    %371 = vsyncpa %s370, 1
    %372 = vsyncpa [#allocation4], 1
    %s373 = scalar_lea.sflag [#allocation4], 1
    %374 = vsyncpa %s373, 1
    %375 = vsyncpa [#allocation9], 1
    %s376 = scalar_lea.sflag [#allocation9], 1
    %377 = vsyncpa %s376, 1

</llo_original>
